<compile_context>
chip_gen: v5e
topology: v5e:2x2
jax: 0.10.0
libtpu: 0.0.40
codegen_flags: <defaults>
</compile_context>

<pallas_src>
import functools

import jax
import jax.numpy as jnp
from jax.experimental import pallas as pl
from jax.experimental.pallas import tpu as pltpu

_N_SPLITS = 2            # leading "parallel" grid axis (2 TCs on v7x)
_OUT_R, _OUT_C = 8, 128  # lane-dense per-split output tile


def _alpha_entropy_kernel(props_ref, pi_ref, v_ref, reward_ref, out_ref,
                          acc_ref, *, inv_nv, inv_b):
    i = pl.program_id(1)

    @pl.when(i == 0)
    def _init():
        acc_ref[...] = jnp.zeros_like(acc_ref)

    # f32 accumulation regardless of input dtype (bf16 inputs are fine).
    diff = v_ref[...].astype(jnp.float32) - reward_ref[...].astype(jnp.float32)
    prod = props_ref[...].astype(jnp.float32) * pi_ref[...].astype(jnp.float32)

    # Single full reductions (no (B,) intermediate); scales folded per step so
    # one scalar accumulator carries v_loss + p_loss together.
    partial = jnp.sum(diff * diff) * inv_nv - jnp.sum(prod) * inv_b
    acc_ref[...] += partial

    @pl.when(i == pl.num_programs(1) - 1)
    def _fin():
        # Lane-dense (8,128) store; wrapper reads element [0, 0] of each split.
        out_ref[...] = jnp.broadcast_to(acc_ref[...], out_ref.shape)


def alpha_entropy(props, v, pi, reward, *, max_tile_rows=2048,
                  vmem_budget_bytes=8 * 1024 * 1024):
    """Pallas implementation of AlphaEntropy.forward. Returns a scalar f32."""
    props = jnp.asarray(props)
    pi = jnp.asarray(pi)
    v = jnp.asarray(v)
    reward = jnp.asarray(reward)
    if v.ndim == 1:
        v = v[:, None]
    if reward.ndim == 1:
        reward = reward[:, None]

    B, A = props.shape
    assert pi.shape == (B, A)
    assert v.shape == reward.shape and v.shape[0] == B
    Cv = v.shape[1]

    # True (unpadded) normalisers.
    inv_nv = 1.0 / float(B * Cv)   # MSE divides by #elements of v
    inv_b = 1.0 / float(B)         # policy term is a batch mean

    # Batch-tile: biggest multiple of 8 such that all four inputs, double
    # buffered, stay within a conservative VMEM budget (safe on v5e/v6e/v7x).
    bytes_per_row = (A * props.dtype.itemsize + A * pi.dtype.itemsize
                     + Cv * (v.dtype.itemsize + reward.dtype.itemsize))
    tb_cap = vmem_budget_bytes // (2 * bytes_per_row)          # 2x = double buffer
    tb_cap = max(8, min(int(max_tile_rows), (int(tb_cap) // 8) * 8))
    rows_per_split = pl.cdiv(B, _N_SPLITS)
    tb = min(tb_cap, ((rows_per_split + 7) // 8) * 8)
    tiles_per_split = pl.cdiv(rows_per_split, tb)
    padded_b = _N_SPLITS * tiles_per_split * tb

    # Zero-pad the ragged batch: padded rows contribute 0 to both sums and the
    # normalisers above use the true B, so semantics are unchanged.
    if padded_b != B:
        pad = padded_b - B
        props = jnp.pad(props, ((0, pad), (0, 0)))
        pi = jnp.pad(pi, ((0, pad), (0, 0)))
        v = jnp.pad(v, ((0, pad), (0, 0)))
        reward = jnp.pad(reward, ((0, pad), (0, 0)))

    kernel = functools.partial(_alpha_entropy_kernel, inv_nv=inv_nv, inv_b=inv_b)

    t = tiles_per_split
    row_map = lambda c, i, _t=t: (c * _t + i, 0)

    cost = pl.CostEstimate(
        flops=3 * B * A + 3 * B * Cv,
        transcendentals=0,
        bytes_accessed=(props.size * props.dtype.itemsize
                        + pi.size * pi.dtype.itemsize
                        + v.size * v.dtype.itemsize
                        + reward.size * reward.dtype.itemsize
                        + _N_SPLITS * _OUT_R * _OUT_C * 4),
    )

    out = pl.pallas_call(
        kernel,
        out_shape=jax.ShapeDtypeStruct((_N_SPLITS * _OUT_R, _OUT_C), jnp.float32),
        grid_spec=pltpu.PrefetchScalarGridSpec(
            num_scalar_prefetch=0,
            grid=(_N_SPLITS, t),
            in_specs=[
                pl.BlockSpec((tb, A), row_map),    # props
                pl.BlockSpec((tb, A), row_map),    # pi
                pl.BlockSpec((tb, Cv), row_map),   # v
                pl.BlockSpec((tb, Cv), row_map),   # reward
            ],
            out_specs=pl.BlockSpec((_OUT_R, _OUT_C), lambda c, i: (c, 0)),
            scratch_shapes=[pltpu.VMEM((1, 1), jnp.float32)],
        ),
        compiler_params=pltpu.CompilerParams(
            dimension_semantics=("parallel", "arbitrary"),
            vmem_limit_bytes=32 * 1024 * 1024,
        ),
        cost_estimate=cost,
    )(props, pi, v, reward)

    # Sum the per-split partials (written at row c*_OUT_R, col 0).
    return jnp.sum(out[::_OUT_R, 0])


def alpha_entropy_ref(props, v, pi, reward):
    """Plain-JAX reference mirroring the PyTorch module."""
    v_loss = jnp.mean((v - reward) ** 2)
    p_loss = -jnp.mean(jnp.sum(props * pi, axis=1))
    return p_loss + v_loss


if __name__ == "__main__":
    key = jax.random.PRNGKey(0)
    k1, k2, k3, k4 = jax.random.split(key, 4)

    B, A = 8, 128  # batch, action-space size (A on the lane axis)

    # props: log-probabilities (as AlphaZero nets emit), pi: target policy
    logits = jax.random.normal(k1, (B, A), dtype=jnp.float32)
    props = jax.nn.log_softmax(logits, axis=1)
    pi = jax.nn.softmax(jax.random.normal(k2, (B, A), dtype=jnp.float32), axis=1)
    v = jnp.tanh(jax.random.normal(k3, (B, 1), dtype=jnp.float32))
    reward = jnp.sign(jax.random.normal(k4, (B, 1), dtype=jnp.float32))

    loss = alpha_entropy(props, v, pi, reward)
    jax.block_until_ready(loss)

    ref = alpha_entropy_ref(props, v, pi, reward)
    assert jnp.allclose(loss, ref, atol=1e-5, rtol=1e-5), (loss, ref)

    print("KERNEL_OK")
</pallas_src>

<mosaic_0001>
module attributes {stable_mosaic.version = 11 : i64} {
  func.func @_alpha_entropy_kernel(%arg0: i32, %arg1: i32, %arg2: memref<8x128xf32, #tpu.memory_space<vmem>>, %arg3: memref<8x128xf32, #tpu.memory_space<vmem>>, %arg4: memref<8x1xf32, #tpu.memory_space<vmem>>, %arg5: memref<8x1xf32, #tpu.memory_space<vmem>>, %arg6: memref<8x128xf32, #tpu.memory_space<vmem>>, %arg7: memref<1x1xf32, #tpu.memory_space<vmem>>) attributes {dimension_semantics = [#tpu.dimension_semantics<parallel>, #tpu.dimension_semantics<arbitrary>], iteration_bounds = array<i64: 2, 1>, scalar_prefetch = 0 : i64, scratch_operands = 1 : i64, tpu.core_type = #tpu.core_type<tc>, window_params = [{transform_indices = @transform_0, window_bounds = array<i64: 8, 128>}, {transform_indices = @transform_1, window_bounds = array<i64: 8, 128>}, {transform_indices = @transform_2, window_bounds = array<i64: 8, 1>}, {transform_indices = @transform_3, window_bounds = array<i64: 8, 1>}, {transform_indices = @transform_4, window_bounds = array<i64: 8, 128>}]} {
    %c0_i32 = arith.constant 0 : i32
    %0 = arith.cmpi eq, %arg1, %c0_i32 : i32
    %1 = arith.extui %0 : i1 to i32
    %c0_i32_0 = arith.constant 0 : i32
    %2 = arith.cmpi ne, %1, %c0_i32_0 : i32
    scf.if %2 {
      %cst_17 = arith.constant 0.000000e+00 : f32
      %28 = vector.broadcast %cst_17 : f32 to vector<1x1xf32>
      %c0_18 = arith.constant 0 : index
      %c0_19 = arith.constant 0 : index
      %29 = vector.load %arg7[%c0_18, %c0_19] : memref<1x1xf32, #tpu.memory_space<vmem>>, vector<1x1xf32>
      tpu.vector_store %arg7[%c0_18, %c0_19], %28 {strides = array<i32>} : memref<1x1xf32, #tpu.memory_space<vmem>>, vector<1x1xf32>,
    } else {
    }
    %c0 = arith.constant 0 : index
    %c0_1 = arith.constant 0 : index
    %3 = vector.load %arg4[%c0, %c0_1] : memref<8x1xf32, #tpu.memory_space<vmem>>, vector<8x1xf32>
    %c0_2 = arith.constant 0 : index
    %c0_3 = arith.constant 0 : index
    %4 = vector.load %arg5[%c0_2, %c0_3] : memref<8x1xf32, #tpu.memory_space<vmem>>, vector<8x1xf32>
    %5 = arith.subf %3, %4 : vector<8x1xf32>
    %c0_4 = arith.constant 0 : index
    %c0_5 = arith.constant 0 : index
    %6 = vector.load %arg2[%c0_4, %c0_5] : memref<8x128xf32, #tpu.memory_space<vmem>>, vector<8x128xf32>
    %c0_6 = arith.constant 0 : index
    %c0_7 = arith.constant 0 : index
    %7 = vector.load %arg3[%c0_6, %c0_7] : memref<8x128xf32, #tpu.memory_space<vmem>>, vector<8x128xf32>
    %8 = arith.mulf %6, %7 : vector<8x128xf32>
    %9 = arith.mulf %5, %5 : vector<8x1xf32>
    %10 = vector.shape_cast %9 : vector<8x1xf32> to vector<1x8x1xf32>
    %cst = arith.constant dense<0.000000e+00> : vector<1xf32>
    %11 = vector.multi_reduction <add>, %10, %cst [1, 2] : vector<1x8x1xf32> to vector<1xf32>
    %12 = vector.shape_cast %11 : vector<1xf32> to vector<1x1x1xf32>
    %13 = vector.extract %12[0, 0, 0] : f32 from vector<1x1x1xf32>
    %cst_8 = arith.constant 1.250000e-01 : f32
    %14 = arith.mulf %13, %cst_8 : f32
    %15 = vector.shape_cast %8 : vector<8x128xf32> to vector<1x8x128xf32>
    %cst_9 = arith.constant dense<0.000000e+00> : vector<1xf32>
    %16 = vector.multi_reduction <add>, %15, %cst_9 [1, 2] : vector<1x8x128xf32> to vector<1xf32>
    %17 = vector.shape_cast %16 : vector<1xf32> to vector<1x1x1xf32>
    %18 = vector.extract %17[0, 0, 0] : f32 from vector<1x1x1xf32>
    %cst_10 = arith.constant 1.250000e-01 : f32
    %19 = arith.mulf %18, %cst_10 : f32
    %20 = arith.subf %14, %19 : f32
    %c0_11 = arith.constant 0 : index
    %c0_12 = arith.constant 0 : index
    %21 = vector.load %arg7[%c0_11, %c0_12] : memref<1x1xf32, #tpu.memory_space<vmem>>, vector<1x1xf32>
    %22 = vector.broadcast %20 : f32 to vector<1x1xf32>
    %23 = arith.addf %21, %22 : vector<1x1xf32>
    %c0_13 = arith.constant 0 : index
    %c0_14 = arith.constant 0 : index
    %24 = vector.load %arg7[%c0_13, %c0_14] : memref<1x1xf32, #tpu.memory_space<vmem>>, vector<1x1xf32>
    tpu.vector_store %arg7[%c0_13, %c0_14], %23 {strides = array<i32>} : memref<1x1xf32, #tpu.memory_space<vmem>>, vector<1x1xf32>,
    %c0_i32_15 = arith.constant 0 : i32
    %25 = arith.cmpi eq, %arg1, %c0_i32_15 : i32
    %26 = arith.extui %25 : i1 to i32
    %c0_i32_16 = arith.constant 0 : i32
    %27 = arith.cmpi ne, %26, %c0_i32_16 : i32
    scf.if %27 {
      %c0_17 = arith.constant 0 : index
      %c0_18 = arith.constant 0 : index
      %28 = vector.load %arg7[%c0_17, %c0_18] : memref<1x1xf32, #tpu.memory_space<vmem>>, vector<1x1xf32>
      %29 = vector.shape_cast %28 : vector<1x1xf32> to vector<1x1xf32>
      %30 = vector.broadcast %29 : vector<1x1xf32> to vector<8x128xf32>
      %c0_19 = arith.constant 0 : index
      %c0_20 = arith.constant 0 : index
      %31 = vector.load %arg6[%c0_19, %c0_20] : memref<8x128xf32, #tpu.memory_space<vmem>>, vector<8x128xf32>
      tpu.vector_store %arg6[%c0_19, %c0_20], %30 {strides = array<i32>} : memref<8x128xf32, #tpu.memory_space<vmem>>, vector<8x128xf32>,
    } else {
    }
    return
  }
  func.func @transform_0(%arg0: i32, %arg1: i32) -> (i32, i32) {
    %c1_i32 = arith.constant 1 : i32
    %0 = arith.muli %arg0, %c1_i32 : i32
    %1 = arith.addi %0, %arg1 : i32
    %c0_i32 = arith.constant 0 : i32
    %c0_i32_0 = arith.constant 0 : i32
    return %1, %c0_i32 : i32, i32
  }
  func.func @transform_1(%arg0: i32, %arg1: i32) -> (i32, i32) {
    %c1_i32 = arith.constant 1 : i32
    %0 = arith.muli %arg0, %c1_i32 : i32
    %1 = arith.addi %0, %arg1 : i32
    %c0_i32 = arith.constant 0 : i32
    %c0_i32_0 = arith.constant 0 : i32
    return %1, %c0_i32 : i32, i32
  }
  func.func @transform_2(%arg0: i32, %arg1: i32) -> (i32, i32) {
    %c1_i32 = arith.constant 1 : i32
    %0 = arith.muli %arg0, %c1_i32 : i32
    %1 = arith.addi %0, %arg1 : i32
    %c0_i32 = arith.constant 0 : i32
    %c0_i32_0 = arith.constant 0 : i32
    return %1, %c0_i32 : i32, i32
  }
  func.func @transform_3(%arg0: i32, %arg1: i32) -> (i32, i32) {
    %c1_i32 = arith.constant 1 : i32
    %0 = arith.muli %arg0, %c1_i32 : i32
    %1 = arith.addi %0, %arg1 : i32
    %c0_i32 = arith.constant 0 : i32
    %c0_i32_0 = arith.constant 0 : i32
    return %1, %c0_i32 : i32, i32
  }
  func.func @transform_4(%arg0: i32, %arg1: i32) -> (i32, i32) {
    %c0_i32 = arith.constant 0 : i32
    %c0_i32_0 = arith.constant 0 : i32
    return %arg0, %c0_i32 : i32, i32
  }
}

</mosaic_0001>

<llo_original>
// kernel: tpu_custom_call.1
$region0: #{tpu_custom_call.1}
  #allocation0 [shape = 'u32[]', space=smem, size = 0x4, offset = 0x4, fixed_abs, tag = 'smem constant byte address 0x4 - core index']
  #allocation1 [shape = 'u32[72,128]{1,0:T(1,128)}', space=vmem, size = 0x9000, scoped, tag = 'internal scratch']
  #allocation2 [shape = 'f32[1,1]{1,0:T(1,128)}', space=vmem, size = 0x200, scoped, tag = 'scratch operand']
  %s0 = inlined_call_operand.vmem [shape: f32[16,128], index: 0, kind: input, shape index: {}]
  %s1 = inlined_call_operand.vmem [shape: f32[16,128], index: 1, kind: input, shape index: {}]
  %s2 = inlined_call_operand.vmem [shape: f32[16,1], index: 2, kind: input, shape index: {}]
  %s3 = inlined_call_operand.vmem [shape: f32[16,1], index: 3, kind: input, shape index: {}]
  %s4 = inlined_call_operand.hbm [shape: f32[16,128], index: 4, kind: output, shape index: {}]
  %s5 = sld [smem:[#allocation0]]
  $region57: #{tpu_custom_call.1} parent=0
    _
  %s7 = ssub.s32 1, %s5
  %s8 = scalar_select 0, %s7, %s5
  $region1: #{tpu_custom_call.1} parent=0
    #allocation3 [shape = 'u8[8192]{0}', space=vmem, size = 0x2000, scoped, tag = 'output window, operand 0']
    #allocation4 [shape = 's32[2]{0}', space=sflag, size = 0x8, scoped, tag = 'scoped memory for tpu_custom_call.1']
    %9 = vsyncpa [#allocation4], 0
    %s10 = scalar_lea.sflag [#allocation4], 1
    %11 = vsyncpa %s10, 0
    loop: start=0, step=1, limit=4
    $region2: #{tpu_custom_call.1} parent=1 // loop_pre_header
      _
    $region3: #{tpu_custom_call.1} parent=1 // loop_header
      %s13 = sphi 0, %s17
      %p14 = scmp.ge.s32.totalorder %s13, 4
      %s20 = sphi 0, %s32
      %s21 = sphi 0, %s28
      %s22 = sphi 0, %s20
      %s23 = sphi 0, %s21
      %s24 = sphi 0, %s22
      %s25 = sphi 0, %s23
      %s37 = sphi 0, %s39
      %s40 = sphi 0, %s37
      %s41 = sphi 0, %s40
      %s57 = sphi 0, %s41
      %s65 = sphi 0, %s67
      %s68 = sphi 0, %s65
      %s69 = sphi 0, %s68
      %s85 = sphi 0, %s69
      %s93 = sphi 0, %s95
      %s96 = sphi 0, %s93
      %s97 = sphi 0, %s96
      %s113 = sphi 0, %s97
      %s121 = sphi 0, %s123
      %s124 = sphi 0, %s121
      %s125 = sphi 0, %s124
      %s141 = sphi 0, %s125
      %s147 = sphi 0, %s149
      %s150 = sphi 0, %s147
      %s151 = sphi 0, %s150
      %s167 = sphi 0, %s151
    $region4: #{tpu_custom_call.1} parent=1 // loop_header_branch
      %16 = sbr.rel (%p14) target = $region8
    $region5: #{tpu_custom_call.1} parent=1 // loop_body
      %s18 = ssub.s32 %s13, 1
      %s19 = ssub.s32 %s13, 2
      %s26 = sadd.s32 1, %s21
      %p27 = scmp.ge.s32.totalorder %s26, 1
      %s28 = scalar_select %p27, 0, %s26
      %s29 = sadd.s32 1, %s20
      %s30 = scalar_select %p27, %s29, %s20
      %p31 = scmp.ge.s32.totalorder %s30, 2
      %s32 = scalar_select %p31, 0, %s30
      %s33 = sadd.s32 %s20, %s21
      %s34 = sadd.s32 %s32, %s28
      %s35 = ssub.s32 %s33, %s34
      %p36 = scmp.eq.s32.totalorder %s35, 0
      %s38 = sadd.s32 %s37, 1
      %s39 = scalar_select %p36, %s37, %s38
      %p42 = pneg %p36
      %p43 = scmp.eq.s32.totalorder %s13, 1
      %p44 = por %p42, %p43
      %p45 = scmp.ne.s32.totalorder %s37, %s40
      %p46 = scmp.eq.s32.totalorder %s13, 0
      %p47 = por %p45, %p46
      %p48 = scmp.ne.s32.totalorder %s37, %s40
      %p49 = scmp.eq.s32.totalorder %s18, 1
      %p50 = por %p48, %p49
      %p51 = scmp.ne.s32.totalorder %s40, %s41
      %p52 = scmp.eq.s32.totalorder %s18, 0
      %p53 = por %p51, %p52
      %p54 = scmp.ne.s32.totalorder %s40, %s41
      %p55 = scmp.eq.s32.totalorder %s19, 1
      %p56 = por %p54, %p55
      %p58 = scmp.ne.s32.totalorder %s41, %s57
      %p59 = scmp.eq.s32.totalorder %s19, 0
      %p60 = por %p58, %p59
      %s61 = sadd.s32 %s20, %s21
      %s62 = sadd.s32 %s32, %s28
      %s63 = ssub.s32 %s61, %s62
      %p64 = scmp.eq.s32.totalorder %s63, 0
      %s66 = sadd.s32 %s65, 1
      %s67 = scalar_select %p64, %s65, %s66
      %p70 = pneg %p64
      %p71 = scmp.eq.s32.totalorder %s13, 1
      %p72 = por %p70, %p71
      %p73 = scmp.ne.s32.totalorder %s65, %s68
      %p74 = scmp.eq.s32.totalorder %s13, 0
      %p75 = por %p73, %p74
      %p76 = scmp.ne.s32.totalorder %s65, %s68
      %p77 = scmp.eq.s32.totalorder %s18, 1
      %p78 = por %p76, %p77
      %p79 = scmp.ne.s32.totalorder %s68, %s69
      %p80 = scmp.eq.s32.totalorder %s18, 0
      %p81 = por %p79, %p80
      %p82 = scmp.ne.s32.totalorder %s68, %s69
      %p83 = scmp.eq.s32.totalorder %s19, 1
      %p84 = por %p82, %p83
      %p86 = scmp.ne.s32.totalorder %s69, %s85
      %p87 = scmp.eq.s32.totalorder %s19, 0
      %p88 = por %p86, %p87
      %s89 = sadd.s32 %s20, %s21
      %s90 = sadd.s32 %s32, %s28
      %s91 = ssub.s32 %s89, %s90
      %p92 = scmp.eq.s32.totalorder %s91, 0
      %s94 = sadd.s32 %s93, 1
      %s95 = scalar_select %p92, %s93, %s94
      %p98 = pneg %p92
      %p99 = scmp.eq.s32.totalorder %s13, 1
      %p100 = por %p98, %p99
      %p101 = scmp.ne.s32.totalorder %s93, %s96
      %p102 = scmp.eq.s32.totalorder %s13, 0
      %p103 = por %p101, %p102
      %p104 = scmp.ne.s32.totalorder %s93, %s96
      %p105 = scmp.eq.s32.totalorder %s18, 1
      %p106 = por %p104, %p105
      %p107 = scmp.ne.s32.totalorder %s96, %s97
      %p108 = scmp.eq.s32.totalorder %s18, 0
      %p109 = por %p107, %p108
      %p110 = scmp.ne.s32.totalorder %s96, %s97
      %p111 = scmp.eq.s32.totalorder %s19, 1
      %p112 = por %p110, %p111
      %p114 = scmp.ne.s32.totalorder %s97, %s113
      %p115 = scmp.eq.s32.totalorder %s19, 0
      %p116 = por %p114, %p115
      %s117 = sadd.s32 %s20, %s21
      %s118 = sadd.s32 %s32, %s28
      %s119 = ssub.s32 %s117, %s118
      %p120 = scmp.eq.s32.totalorder %s119, 0
      %s122 = sadd.s32 %s121, 1
      %s123 = scalar_select %p120, %s121, %s122
      %p126 = pneg %p120
      %p127 = scmp.eq.s32.totalorder %s13, 1
      %p128 = por %p126, %p127
      %p129 = scmp.ne.s32.totalorder %s121, %s124
      %p130 = scmp.eq.s32.totalorder %s13, 0
      %p131 = por %p129, %p130
      %p132 = scmp.ne.s32.totalorder %s121, %s124
      %p133 = scmp.eq.s32.totalorder %s18, 1
      %p134 = por %p132, %p133
      %p135 = scmp.ne.s32.totalorder %s124, %s125
      %p136 = scmp.eq.s32.totalorder %s18, 0
      %p137 = por %p135, %p136
      %p138 = scmp.ne.s32.totalorder %s124, %s125
      %p139 = scmp.eq.s32.totalorder %s19, 1
      %p140 = por %p138, %p139
      %p142 = scmp.ne.s32.totalorder %s125, %s141
      %p143 = scmp.eq.s32.totalorder %s19, 0
      %p144 = por %p142, %p143
      %s145 = ssub.s32 %s20, %s32
      %p146 = scmp.eq.s32.totalorder %s145, 0
      %s148 = sadd.s32 %s147, 1
      %s149 = scalar_select %p146, %s147, %s148
      %p152 = pneg %p146
      %p153 = scmp.eq.s32.totalorder %s13, 1
      %p154 = por %p152, %p153
      %p155 = scmp.ne.s32.totalorder %s147, %s150
      %p156 = scmp.eq.s32.totalorder %s13, 0
      %p157 = por %p155, %p156
      %p158 = scmp.ne.s32.totalorder %s147, %s150
      %p159 = scmp.eq.s32.totalorder %s18, 1
      %p160 = por %p158, %p159
      %p161 = scmp.ne.s32.totalorder %s150, %s151
      %p162 = scmp.eq.s32.totalorder %s18, 0
      %p163 = por %p161, %p162
      %p164 = scmp.ne.s32.totalorder %s150, %s151
      %p165 = scmp.eq.s32.totalorder %s19, 1
      %p166 = por %p164, %p165
      %p168 = scmp.ne.s32.totalorder %s151, %s167
      %p169 = scmp.eq.s32.totalorder %s19, 0
      %p170 = por %p168, %p169
      %p171 = scmp.le.s32.totalorder 1, %s13
      %p172 = scmp.lt.s32.totalorder %s13, 3
      %p173 = pnand %p171, %p172
      %p174 = pneg %p173
      // Predicated region
      $region9: #{tpu_custom_call.1} parent=5 // pred_check
        _
      $region10: #{tpu_custom_call.1} parent=5 // pred_check_branch
        %176 = sbr.rel (%p173) target = $region12
      $region11: #{tpu_custom_call.1} parent=5 // pred_region
        %s177 = ssub.s32 %s13, 1
      $region12: #{tpu_custom_call.1} parent=5 // pred_fallthru
        _
      %p178 = scmp.lt.s32.totalorder %s13, 2
      // Predicated region
      $region13: #{tpu_custom_call.1} parent=5 // pred_check
        %p179 = pneg %p178
      $region14: #{tpu_custom_call.1} parent=5 // pred_check_branch
        %181 = sbr.rel (%p179) target = $region16
      $region15: #{tpu_custom_call.1} parent=5 // pred_region
        // Predicated region
        $region17: #{tpu_custom_call.1} parent=15 // pred_check
          %p182 = pneg %p47
        $region18: #{tpu_custom_call.1} parent=15 // pred_check_branch
          %184 = sbr.rel (%p182) target = $region20
        $region19: #{tpu_custom_call.1} parent=15 // pred_region
          %s185 = sadd.s32 %s20, %s21
          %p186 = scmp.lt.s32.totalorder %s185, 1
          %s187 = scalar_select %p186, %s185, 1
          %s188 = smul.addr %s187, 8
          %s189 = scalar_lea.vmem %s0, %s188
          %s190 = sadd.s32 %s20, %s21
        $region20: #{tpu_custom_call.1} parent=15 // pred_fallthru
          _
        // Predicated region
        $region21: #{tpu_custom_call.1} parent=15 // pred_check
          %p191 = pneg %p75
        $region22: #{tpu_custom_call.1} parent=15 // pred_check_branch
          %193 = sbr.rel (%p191) target = $region24
        $region23: #{tpu_custom_call.1} parent=15 // pred_region
          %s194 = sadd.s32 %s20, %s21
          %p195 = scmp.lt.s32.totalorder %s194, 1
          %s196 = scalar_select %p195, %s194, 1
          %s197 = smul.addr %s196, 8
          %s198 = scalar_lea.vmem %s1, %s197
          %s199 = sadd.s32 %s20, %s21
        $region24: #{tpu_custom_call.1} parent=15 // pred_fallthru
          _
        // Predicated region
        $region25: #{tpu_custom_call.1} parent=15 // pred_check
          %p200 = pneg %p103
        $region26: #{tpu_custom_call.1} parent=15 // pred_check_branch
          %202 = sbr.rel (%p200) target = $region28
        $region27: #{tpu_custom_call.1} parent=15 // pred_region
          %s203 = sadd.s32 %s20, %s21
          %p204 = scmp.lt.s32.totalorder %s203, 1
          %s205 = scalar_select %p204, %s203, 1
          %s206 = smul.addr %s205, 8
          %s207 = scalar_lea.vmem %s2, %s206
          %s208 = sadd.s32 %s20, %s21
        $region28: #{tpu_custom_call.1} parent=15 // pred_fallthru
          _
        // Predicated region
        $region29: #{tpu_custom_call.1} parent=15 // pred_check
          %p209 = pneg %p131
        $region30: #{tpu_custom_call.1} parent=15 // pred_check_branch
          %211 = sbr.rel (%p209) target = $region32
        $region31: #{tpu_custom_call.1} parent=15 // pred_region
          %s212 = sadd.s32 %s20, %s21
          %p213 = scmp.lt.s32.totalorder %s212, 1
          %s214 = scalar_select %p213, %s212, 1
          %s215 = smul.addr %s214, 8
          %s216 = scalar_lea.vmem %s3, %s215
          %s217 = sadd.s32 %s20, %s21
        $region32: #{tpu_custom_call.1} parent=15 // pred_fallthru
          _
      $region16: #{tpu_custom_call.1} parent=5 // pred_fallthru
        _
      %p218 = scmp.le.s32.totalorder 1, %s13
      %p219 = scmp.lt.s32.totalorder %s13, 3
      %p220 = pnand %p218, %p219
      %p221 = pneg %p220
      // Predicated region
      $region33: #{tpu_custom_call.1} parent=5 // pred_check
        _
      $region34: #{tpu_custom_call.1} parent=5 // pred_check_branch
        %223 = sbr.rel (%p220) target = $region36
      $region35: #{tpu_custom_call.1} parent=5 // pred_region
        %s224 = ssub.s32 %s13, 1
        %s225 = sadd.s32 %s22, %s23
        %p226 = scmp.lt.s32.totalorder %s225, 1
        %s227 = scalar_select %p226, %s225, 1
        %s228 = smul.addr %s227, 8
        %s229 = scalar_lea.vmem %s0, %s228
        %p230 = pneg %p53
        %p231 = pneg %p50
        %s232 = sadd.s32 %s22, %s23
        %p233 = scmp.lt.s32.totalorder %s232, 1
        %s234 = scalar_select %p233, %s232, 1
        %s235 = smul.addr %s234, 8
        %s236 = scalar_lea.vmem %s1, %s235
        %p237 = pneg %p81
        %p238 = pneg %p78
        %s239 = sadd.s32 %s22, %s23
        %p240 = scmp.lt.s32.totalorder %s239, 1
        %s241 = scalar_select %p240, %s239, 1
        %s242 = smul.addr %s241, 8
        %s243 = scalar_lea.vmem %s2, %s242
        %p244 = pneg %p109
        %p245 = pneg %p106
        %s246 = sadd.s32 %s22, %s23
        %p247 = scmp.lt.s32.totalorder %s246, 1
        %s248 = scalar_select %p247, %s246, 1
        %s249 = smul.addr %s248, 8
        %s250 = scalar_lea.vmem %s3, %s249
        %p251 = pneg %p137
        %p252 = pneg %p134
        %p253 = pneg %p163
        %p254 = pneg %p160
        %s255 = sand.u32 %s150, 1
        %s256 = scalar_lea.sflag [#allocation4], %s255
        %s257 = sand.u32 %s150, 1
        %s258 = smul.addr %s257, 8
        %s259 = scalar_lea.vmem [#allocation3], %s258
        %s260 = sadd.s32 %s22, %s23
        %p261 = scmp.lt.s32.totalorder %s260, 1
        %s262 = scalar_select %p261, %s260, 1
        %s263 = smul.addr %s262, 8
        %s264 = scalar_lea.vmem %s0, %s263
        %s265 = sadd.s32 %s22, %s23
        %s266 = sadd.s32 %s22, %s23
        %p267 = scmp.lt.s32.totalorder %s266, 1
        %s268 = scalar_select %p267, %s266, 1
        %s269 = smul.addr %s268, 8
        %s270 = scalar_lea.vmem %s1, %s269
        %s271 = sadd.s32 %s22, %s23
        %s272 = sadd.s32 %s22, %s23
        %p273 = scmp.lt.s32.totalorder %s272, 1
        %s274 = scalar_select %p273, %s272, 1
        %s275 = smul.addr %s274, 8
        %s276 = scalar_lea.vmem %s2, %s275
        %s277 = sadd.s32 %s22, %s23
        %s278 = sadd.s32 %s22, %s23
        %p279 = scmp.lt.s32.totalorder %s278, 1
        %s280 = scalar_select %p279, %s278, 1
        %s281 = smul.addr %s280, 8
        %s282 = scalar_lea.vmem %s3, %s281
        %s283 = sadd.s32 %s22, %s23
        %p284 = scmp.eq.s32.totalorder %s23, 0
        // Predicated region
        $region37: #{tpu_custom_call.1} parent=35 // pred_check
          %p285 = pneg %p284
        $region38: #{tpu_custom_call.1} parent=35 // pred_check_branch
          %287 = sbr.rel (%p285) target = $region40
        $region39: #{tpu_custom_call.1} parent=35 // pred_region
          %vm288 = vcmask 0
          %289 = vst.msk [vmem:[#allocation2] sm:$0x1] %vm288, 0.0
        $region40: #{tpu_custom_call.1} parent=35 // pred_fallthru
          _
        %v290 = vld [vmem:[%s276] sm:$0xff]
        %v291 = vld [vmem:[%s282] sm:$0xff]
        %v292 = vsub.f32 %v290, %v291
        %v293 = vld [vmem:[%s264] sm:$0xff]
        %v294 = vld [vmem:[%s270] sm:$0xff]
        %v295 = vmul.f32 %v293, %v294
        %v296 = vmul.f32 %v292, %v292
        %vm297 = vcmask 7168
        %v298 = vsel %vm297, %v296, 0.0
        %299 = vadd.xlane.f32.xlu0 %v298
        %v300 = vpop.xlane.xlu0 %299
        %v301 = vrot.slane %v300, 4
        %v302 = vadd.f32 %v300, %v301
        %v303 = vrot.slane %v302, 2
        %v304 = vadd.f32 %v302, %v303
        %v305 = vrot.slane %v304, 1
        %v306 = vadd.f32 %v304, %v305
        %s307 = vtos %v306
        %s308 = smul.f32 %s307, 0.125
        %309 = vadd.xlane.f32.xlu0 %v295
        %v310 = vpop.xlane.xlu0 %309
        %v311 = vrot.slane %v310, 4
        %v312 = vadd.f32 %v310, %v311
        %v313 = vrot.slane %v312, 2
        %v314 = vadd.f32 %v312, %v313
        %v315 = vrot.slane %v314, 1
        %v316 = vadd.f32 %v314, %v315
        %s317 = vtos %v316
        %s318 = smul.f32 %s317, 0.125
        %s319 = ssub.f32 %s308, %s318
        %v320 = vld [vmem:[#allocation2] sm:$0x1]
        %v321 = vstv %s319
        %v322 = vadd.f32 %v320, %v321
        %vm323 = vcmask 0
        %324 = vst.msk [vmem:[#allocation2] sm:$0x1] %vm323, %v322
        // Predicated region
        $region41: #{tpu_custom_call.1} parent=35 // pred_check
          %p325 = pneg %p284
        $region42: #{tpu_custom_call.1} parent=35 // pred_check_branch
          %327 = sbr.rel (%p325) target = $region44
        $region43: #{tpu_custom_call.1} parent=35 // pred_region
          %v328 = vld [vmem:[#allocation2] sm:$0x1]
          %v330 = vperm.slane %v328, 0
          %331 = vset.pattern.permute.xlu0 0
          %332 = vperm.xlu0 %331, %v330
          %v333 = vpop.permute.xlu0 %332
          %335 = vst [vmem:[%s259] sm:$0xff] %v333
        $region44: #{tpu_custom_call.1} parent=35 // pred_fallthru
          _
        %s336 = sand.u32 %s150, 1
        %s337 = scalar_lea.sflag [#allocation4], %s336
        %s338 = sand.u32 %s150, 1
        %s339 = smul.addr %s338, 8
        %s340 = scalar_lea.vmem [#allocation3], %s339
        // Predicated region
        $region45: #{tpu_custom_call.1} parent=35 // pred_check
          %p341 = pneg %p160
        $region46: #{tpu_custom_call.1} parent=35 // pred_check_branch
          %343 = sbr.rel (%p341) target = $region48
        $region47: #{tpu_custom_call.1} parent=35 // pred_region
          %345 = vsyncadd %s337, 0
          %s346 = smul.addr %s22, 8
          %s347 = scalar_lea.hbm %s4, %s346
          %s349 = sshll.u32 %s340, 4
          %s350 = int_to_ptr.vmem [resolvable:$true] %s349
          %s351 = sshll.u32 %s347, 4
          %s352 = int_to_ptr.hbm [resolvable:$true] %s351
          %354 = dma.vmem_to_hbm [thread:$0]  %s350, 128, %s352, %s337
        $region48: #{tpu_custom_call.1} parent=35 // pred_fallthru
          _
      $region36: #{tpu_custom_call.1} parent=5 // pred_fallthru
        _
      %p355 = scmp.le.s32.totalorder 2, %s13
      // Predicated region
      $region49: #{tpu_custom_call.1} parent=5 // pred_check
        %p356 = pneg %p355
      $region50: #{tpu_custom_call.1} parent=5 // pred_check_branch
        %358 = sbr.rel (%p356) target = $region52
      $region51: #{tpu_custom_call.1} parent=5 // pred_region
        %s359 = ssub.s32 %s13, 2
        // Predicated region
        $region53: #{tpu_custom_call.1} parent=51 // pred_check
          %p360 = pneg %p166
        $region54: #{tpu_custom_call.1} parent=51 // pred_check_branch
          %362 = sbr.rel (%p360) target = $region56
        $region55: #{tpu_custom_call.1} parent=51 // pred_region
          %s363 = sand.u32 %s151, 1
          %s364 = scalar_lea.sflag [#allocation4], %s363
          %s365 = sand.u32 %s151, 1
          %s366 = smul.addr %s365, 8
          %s367 = scalar_lea.vmem [#allocation3], %s366
          %369 = dma.done %s364, 128
        $region56: #{tpu_custom_call.1} parent=51 // pred_fallthru
          _
      $region52: #{tpu_custom_call.1} parent=5 // pred_fallthru
        _
    $region6: #{tpu_custom_call.1} parent=1 // loop_footer
      %s17 = sadd.s32 1, %s13
    $region7: #{tpu_custom_call.1} parent=1 // loop_footer_branch
      %12 = sbr.rel target = $region3
    $region8: #{tpu_custom_call.1} parent=1 // loop_exit
      _
    %370 = vsyncpa [#allocation4], 1
    %s371 = scalar_lea.sflag [#allocation4], 1
    %372 = vsyncpa %s371, 1

</llo_original>
